<compile_context>
chip_gen: v6e
topology: v6e:2x2x1
jax: 0.10.0
libtpu: 0.0.40
codegen_flags: <defaults>
</compile_context>

<pallas_src>
import functools

import jax
import jax.numpy as jnp
from jax import lax
from jax.experimental import pallas as pl
from jax.experimental.pallas import tpu as pltpu

SCALE = 33.3333333333  # MoCoMarginsLossConfig.scale (default)

_LANE = 128
_SUBLANE = 8
_TILE_VMEM_BUDGET = 24 * 1024 * 1024   # budget for resident tiles + f32 temporaries
_VMEM_LIMIT_BYTES = 48 * 1024 * 1024   # requested scoped VMEM (< v7x 64 MiB physical)


def _round_up(x, m):
    return ((x + m - 1) // m) * m


def _moco_ntxent_kernel(q_ref, k_ref, queue_ref, loss_ref,
                        m_ref, l_ref, pos_ref, qs_ref,
                        *, scale, k_total, tk, mask_k):
    # q_ref/k_ref: (tn, C) input dtype, queue_ref: (C, tk) matmul dtype,
    # loss_ref: (tn, 128) f32 (lane-broadcast per-row loss),
    # m_ref/l_ref/pos_ref: (tn, 1) f32 scratch, qs_ref: (tn, C) matmul dtype scratch.
    j = pl.program_id(1)

    @pl.when(j == 0)
    def _init():
        qf = q_ref[...].astype(jnp.float32)
        kf = k_ref[...].astype(jnp.float32)
        pos_s = scale * jnp.sum(qf * kf, axis=1, keepdims=True)      # (tn, 1) f32
        pos_ref[...] = pos_s
        # Fold the positive column into the online logsumexp.
        m_ref[...] = pos_s                                           # running max
        l_ref[...] = jnp.ones_like(pos_s)                            # exp(pos - m) = 1
        # Temperature scale folded into the small (tn, C) operand, computed once
        # per N tile in f32 and stored in the MXU feed dtype.
        qs_ref[...] = (qf * scale).astype(qs_ref.dtype)

    # One MXU matmul per K tile, f32 accumulation.
    neg_s = jnp.dot(qs_ref[...], queue_ref[...],
                    preferred_element_type=jnp.float32)              # (tn, tk) f32

    def _online_update(s):
        m_prev = m_ref[...]
        m_new = jnp.maximum(m_prev, jnp.max(s, axis=1, keepdims=True))
        alpha = jnp.exp(m_prev - m_new)
        l_ref[...] = alpha * l_ref[...] + jnp.sum(jnp.exp(s - m_new),
                                                  axis=1, keepdims=True)
        m_ref[...] = m_new

    if mask_k:
        last_j = pl.num_programs(1) - 1

        @pl.when(j != last_j)
        def _update_full():                                          # no masking work
            _online_update(neg_s)

        @pl.when(j == last_j)
        def _update_masked():                                        # last tile only
            col = j * tk + lax.broadcasted_iota(jnp.int32, neg_s.shape, 1)
            _online_update(jnp.where(col < k_total, neg_s, -jnp.inf))
    else:
        _online_update(neg_s)

    @pl.when(j == pl.num_programs(1) - 1)
    def _finalize():
        lse = m_ref[...] + jnp.log(l_ref[...])
        loss_col = lse - pos_ref[...]                                # (tn, 1) per-row CE
        # Lane-dense (unmasked) store; wrapper reads column 0.
        loss_ref[...] = jnp.broadcast_to(loss_col, loss_ref.shape)


def moco_ntxent_loss(query, key, queue, *, scale=SCALE,
                     matmul_dtype=jnp.bfloat16, num_n_tiles=1,
                     tn=None, tk=None):
    """query: (N, C), key: (N, C), queue: (C, K) -> scalar NT-Xent loss.

    matmul_dtype: dtype fed to the MXU for query*scale and the queue
      (bf16 default: fast MXU path, half the queue HBM traffic; pass
      jnp.float32 for the bit-accurate path).
    num_n_tiles: target number of N tiles (1 = queue streamed once; use 2 on
      v7x to shard the parallel N axis over both TensorCores).
    """
    N, C = query.shape
    Cq, K = queue.shape
    assert C == Cq, "query feature dim must match queue rows"

    in_isz = jnp.dtype(query.dtype).itemsize
    if matmul_dtype is None:
        matmul_dtype = query.dtype
    mm_isz = jnp.dtype(matmul_dtype).itemsize

    # ---- N tile: whole batch per tile (per core), sublane-aligned -----------
    def _fixed_bytes(t):
        # query + key tiles (x2 buffers each), scaled-query scratch, output tile, stats.
        return 4 * t * C * in_isz + t * C * mm_isz + t * _LANE * 4 + 3 * t * 4

    if tn is None:
        tn = _round_up(max(-(-N // max(num_n_tiles, 1)), _SUBLANE), _SUBLANE)
        while tn > _SUBLANE and _fixed_bytes(tn) > _TILE_VMEM_BUDGET // 2:
            tn = _round_up(tn // 2, _SUBLANE)
    n_pad = _round_up(N, tn)
    fixed = _fixed_bytes(tn)

    # ---- K tile: fill the remaining VMEM budget ------------------------------
    if tk is None:
        # double-buffered (C, tk) queue tile + f32 neg_s / exp temporaries.
        per_col = 2 * C * mm_isz + 2 * tn * 4
        avail = max(_TILE_VMEM_BUDGET - fixed, 0)
        tk = max(_LANE, min(_round_up(K, _LANE),
                            (avail // per_col) // _LANE * _LANE,
                            8192))
    k_pad = _round_up(K, tk)
    mask_k = (k_pad != K)

    q, kk = query, key
    qu = queue if queue.dtype == matmul_dtype else queue.astype(matmul_dtype)
    if n_pad != N:   # zero rows: finite per-row loss, dropped before the mean
        q = jnp.pad(q, ((0, n_pad - N), (0, 0)))
        kk = jnp.pad(kk, ((0, n_pad - N), (0, 0)))
    if k_pad != K:   # zero columns: masked to -inf (last K tile only) in-kernel
        qu = jnp.pad(qu, ((0, 0), (0, k_pad - K)))

    grid = (n_pad // tn, k_pad // tk)
    kernel = functools.partial(_moco_ntxent_kernel, scale=scale,
                               k_total=K, tk=tk, mask_k=mask_k)

    n_tiles = grid[0]
    bytes_accessed = int(2 * n_pad * C * in_isz            # query + key (read once)
                         + n_tiles * C * k_pad * mm_isz    # queue, re-read per N tile
                         + n_pad * _LANE * 4)              # lane-broadcast output

    per_row = pl.pallas_call(
        kernel,
        out_shape=jax.ShapeDtypeStruct((n_pad, _LANE), jnp.float32),
        grid_spec=pltpu.PrefetchScalarGridSpec(
            num_scalar_prefetch=0,
            grid=grid,
            in_specs=[
                pl.BlockSpec((tn, C), lambda i, j: (i, 0)),   # query tile (resident over j)
                pl.BlockSpec((tn, C), lambda i, j: (i, 0)),   # key tile   (resident over j)
                pl.BlockSpec((C, tk), lambda i, j: (0, j)),   # queue tile (streams over j)
            ],
            out_specs=pl.BlockSpec((tn, _LANE), lambda i, j: (i, 0)),
            scratch_shapes=[
                pltpu.VMEM((tn, 1), jnp.float32),     # running max m
                pltpu.VMEM((tn, 1), jnp.float32),     # running sum l
                pltpu.VMEM((tn, 1), jnp.float32),     # scaled positive logit
                pltpu.VMEM((tn, C), matmul_dtype),    # scale * query, MXU feed dtype
            ],
        ),
        compiler_params=pltpu.CompilerParams(
            dimension_semantics=("parallel", "arbitrary"),
            vmem_limit_bytes=_VMEM_LIMIT_BYTES),
        cost_estimate=pl.CostEstimate(
            flops=2 * n_pad * C * k_pad,
            transcendentals=n_pad * k_pad,
            bytes_accessed=bytes_accessed),
    )(q, kk, qu)

    return jnp.mean(per_row[:N, 0])


def _reference_loss(query, key, queue, scale=SCALE):
    # Pure-JAX reference of the PyTorch forward (labels=None).
    pos = jnp.sum(query * key, axis=1, keepdims=True)          # (N, 1)
    neg = query @ queue                                        # (N, K)
    logits = scale * jnp.concatenate([pos, neg], axis=1)       # (N, 1+K)
    lse = jax.scipy.special.logsumexp(logits, axis=1)
    return jnp.mean(lse - logits[:, 0])


def _make_inputs(key0, n, c, k):
    kq, kk, kqueue = jax.random.split(key0, 3)
    query = jax.random.normal(kq, (n, c), dtype=jnp.float32)
    query = query / jnp.linalg.norm(query, axis=1, keepdims=True)
    key = jax.random.normal(kk, (n, c), dtype=jnp.float32)
    key = key / jnp.linalg.norm(key, axis=1, keepdims=True)
    queue = jax.random.normal(kqueue, (c, k), dtype=jnp.float32)
    queue = queue / jnp.linalg.norm(queue, axis=0, keepdims=True)
    return query, key, queue


if __name__ == "__main__":
    # Case 1 (f32 MXU path): ragged shapes (N=10 -> 16-row tile; K=200 with tk=128
    # -> 2 K tiles, last one masked) exercises online-lse + last-tile-only masking.
    q1, k1, qu1 = _make_inputs(jax.random.PRNGKey(0), 10, 32, 200)
    loss1 = jax.block_until_ready(
        moco_ntxent_loss(q1, k1, qu1, matmul_dtype=jnp.float32, tk=128))
    ref1 = _reference_loss(q1, k1, qu1)
    assert jnp.allclose(loss1, ref1, rtol=1e-5, atol=1e-5), (loss1, ref1)

    # Case 2 (f32 MXU path): exact-fit shapes, auto tiles, single K tile, no mask.
    q2, k2, qu2 = _make_inputs(jax.random.PRNGKey(1), 8, 32, 128)
    loss2 = jax.block_until_ready(
        moco_ntxent_loss(q2, k2, qu2, matmul_dtype=jnp.float32))
    ref2 = _reference_loss(q2, k2, qu2)
    assert jnp.allclose(loss2, ref2, rtol=1e-5, atol=1e-5), (loss2, ref2)

    # Case 3 (default bf16 MXU path): loose tolerance vs. the f32 reference —
    # bf16 rounding of scale*query and the queue; f32 accumulation preserved.
    q3, k3, qu3 = _make_inputs(jax.random.PRNGKey(2), 16, 64, 384)
    loss3 = jax.block_until_ready(moco_ntxent_loss(q3, k3, qu3))
    ref3 = _reference_loss(q3, k3, qu3)
    assert jnp.allclose(loss3, ref3, rtol=5e-2, atol=2e-1), (loss3, ref3)

    print("KERNEL_OK")
</pallas_src>

<mosaic_0001>
module attributes {stable_mosaic.version = 11 : i64} {
  func.func @_moco_ntxent_kernel(%arg0: i32, %arg1: i32, %arg2: memref<16x32xf32, #tpu.memory_space<vmem>>, %arg3: memref<16x32xf32, #tpu.memory_space<vmem>>, %arg4: memref<32x128xf32, #tpu.memory_space<vmem>>, %arg5: memref<16x128xf32, #tpu.memory_space<vmem>>, %arg6: memref<16x1xf32, #tpu.memory_space<vmem>>, %arg7: memref<16x1xf32, #tpu.memory_space<vmem>>, %arg8: memref<16x1xf32, #tpu.memory_space<vmem>>, %arg9: memref<16x32xf32, #tpu.memory_space<vmem>>) attributes {dimension_semantics = [#tpu.dimension_semantics<parallel>, #tpu.dimension_semantics<arbitrary>], iteration_bounds = array<i64: 1, 2>, scalar_prefetch = 0 : i64, scratch_operands = 4 : i64, tpu.core_type = #tpu.core_type<tc>, window_params = [{transform_indices = @transform_0, window_bounds = array<i64: 16, 32>}, {transform_indices = @transform_1, window_bounds = array<i64: 16, 32>}, {transform_indices = @transform_2, window_bounds = array<i64: 32, 128>}, {transform_indices = @transform_3, window_bounds = array<i64: 16, 128>}]} {
    %c0_i32 = arith.constant 0 : i32
    %0 = arith.cmpi eq, %arg1, %c0_i32 : i32
    %1 = arith.extui %0 : i1 to i32
    %c0_i32_0 = arith.constant 0 : i32
    %2 = arith.cmpi ne, %1, %c0_i32_0 : i32
    scf.if %2 {
      %c0_9 = arith.constant 0 : index
      %c0_10 = arith.constant 0 : index
      %15 = vector.load %arg2[%c0_9, %c0_10] : memref<16x32xf32, #tpu.memory_space<vmem>>, vector<16x32xf32>
      %c0_11 = arith.constant 0 : index
      %c0_12 = arith.constant 0 : index
      %16 = vector.load %arg3[%c0_11, %c0_12] : memref<16x32xf32, #tpu.memory_space<vmem>>, vector<16x32xf32>
      %17 = arith.mulf %15, %16 : vector<16x32xf32>
      %cst_13 = arith.constant dense<0.000000e+00> : vector<16xf32>
      %18 = vector.multi_reduction <add>, %17, %cst_13 [1] : vector<16x32xf32> to vector<16xf32>
      %19 = vector.shape_cast %18 : vector<16xf32> to vector<16x1xf32>
      %cst_14 = arith.constant 33.3333321 : f32
      %20 = vector.broadcast %cst_14 : f32 to vector<16x1xf32>
      %21 = arith.mulf %20, %19 : vector<16x1xf32>
      %c0_15 = arith.constant 0 : index
      %c0_16 = arith.constant 0 : index
      %22 = vector.load %arg8[%c0_15, %c0_16] : memref<16x1xf32, #tpu.memory_space<vmem>>, vector<16x1xf32>
      tpu.vector_store %arg8[%c0_15, %c0_16], %21 {strides = array<i32>} : memref<16x1xf32, #tpu.memory_space<vmem>>, vector<16x1xf32>,
      %c0_17 = arith.constant 0 : index
      %c0_18 = arith.constant 0 : index
      %23 = vector.load %arg6[%c0_17, %c0_18] : memref<16x1xf32, #tpu.memory_space<vmem>>, vector<16x1xf32>
      tpu.vector_store %arg6[%c0_17, %c0_18], %21 {strides = array<i32>} : memref<16x1xf32, #tpu.memory_space<vmem>>, vector<16x1xf32>,
      %cst_19 = arith.constant 1.000000e+00 : f32
      %24 = vector.broadcast %cst_19 : f32 to vector<16x1xf32>
      %c0_20 = arith.constant 0 : index
      %c0_21 = arith.constant 0 : index
      %25 = vector.load %arg7[%c0_20, %c0_21] : memref<16x1xf32, #tpu.memory_space<vmem>>, vector<16x1xf32>
      tpu.vector_store %arg7[%c0_20, %c0_21], %24 {strides = array<i32>} : memref<16x1xf32, #tpu.memory_space<vmem>>, vector<16x1xf32>,
      %cst_22 = arith.constant 33.3333321 : f32
      %26 = vector.broadcast %cst_22 : f32 to vector<16x32xf32>
      %27 = arith.mulf %15, %26 : vector<16x32xf32>
      %c0_23 = arith.constant 0 : index
      %c0_24 = arith.constant 0 : index
      %28 = vector.load %arg9[%c0_23, %c0_24] : memref<16x32xf32, #tpu.memory_space<vmem>>, vector<16x32xf32>
      tpu.vector_store %arg9[%c0_23, %c0_24], %27 {strides = array<i32>} : memref<16x32xf32, #tpu.memory_space<vmem>>, vector<16x32xf32>,
    } else {
    }
    %c0 = arith.constant 0 : index
    %c0_1 = arith.constant 0 : index
    %3 = vector.load %arg9[%c0, %c0_1] : memref<16x32xf32, #tpu.memory_space<vmem>>, vector<16x32xf32>
    %c0_2 = arith.constant 0 : index
    %c0_3 = arith.constant 0 : index
    %4 = vector.load %arg4[%c0_2, %c0_3] : memref<32x128xf32, #tpu.memory_space<vmem>>, vector<32x128xf32>
    %cst = arith.constant dense<0.000000e+00> : vector<16x128xf32>
    %5 = tpu.matmul %3, %4, %cst {dimension_numbers = #tpu.dot_dimension_numbers<[1], [0], [0], [1], [0, 0, 1, 1], [], []>} : vector<16x32xf32>, vector<32x128xf32>, vector<16x128xf32> -> vector<16x128xf32>
    %c1_i32 = arith.constant 1 : i32
    %6 = arith.cmpi ne, %arg1, %c1_i32 : i32
    %7 = arith.extui %6 : i1 to i32
    %c0_i32_4 = arith.constant 0 : i32
    %8 = arith.cmpi ne, %7, %c0_i32_4 : i32
    scf.if %8 {
      %c0_9 = arith.constant 0 : index
      %c0_10 = arith.constant 0 : index
      %15 = vector.load %arg6[%c0_9, %c0_10] : memref<16x1xf32, #tpu.memory_space<vmem>>, vector<16x1xf32>
      %cst_11 = arith.constant dense<0xFF800000> : vector<16xf32>
      %16 = vector.multi_reduction <maximumf>, %5, %cst_11 [1] : vector<16x128xf32> to vector<16xf32>
      %17 = vector.shape_cast %16 : vector<16xf32> to vector<16x1xf32>
      %18 = arith.maximumf %15, %17 : vector<16x1xf32>
      %19 = arith.subf %15, %18 : vector<16x1xf32>
      %20 = math.exp %19 : vector<16x1xf32>
      %c0_12 = arith.constant 0 : index
      %c0_13 = arith.constant 0 : index
      %21 = vector.load %arg7[%c0_12, %c0_13] : memref<16x1xf32, #tpu.memory_space<vmem>>, vector<16x1xf32>
      %22 = arith.mulf %20, %21 : vector<16x1xf32>
      %23 = vector.broadcast %18 : vector<16x1xf32> to vector<16x128xf32>
      %24 = arith.subf %5, %23 : vector<16x128xf32>
      %25 = math.exp %24 : vector<16x128xf32>
      %cst_14 = arith.constant dense<0.000000e+00> : vector<16xf32>
      %26 = vector.multi_reduction <add>, %25, %cst_14 [1] : vector<16x128xf32> to vector<16xf32>
      %27 = vector.shape_cast %26 : vector<16xf32> to vector<16x1xf32>
      %28 = arith.addf %22, %27 : vector<16x1xf32>
      %c0_15 = arith.constant 0 : index
      %c0_16 = arith.constant 0 : index
      %29 = vector.load %arg7[%c0_15, %c0_16] : memref<16x1xf32, #tpu.memory_space<vmem>>, vector<16x1xf32>
      tpu.vector_store %arg7[%c0_15, %c0_16], %28 {strides = array<i32>} : memref<16x1xf32, #tpu.memory_space<vmem>>, vector<16x1xf32>,
      %c0_17 = arith.constant 0 : index
      %c0_18 = arith.constant 0 : index
      %30 = vector.load %arg6[%c0_17, %c0_18] : memref<16x1xf32, #tpu.memory_space<vmem>>, vector<16x1xf32>
      tpu.vector_store %arg6[%c0_17, %c0_18], %18 {strides = array<i32>} : memref<16x1xf32, #tpu.memory_space<vmem>>, vector<16x1xf32>,
    } else {
    }
    %c1_i32_5 = arith.constant 1 : i32
    %9 = arith.cmpi eq, %arg1, %c1_i32_5 : i32
    %10 = arith.extui %9 : i1 to i32
    %c0_i32_6 = arith.constant 0 : i32
    %11 = arith.cmpi ne, %10, %c0_i32_6 : i32
    scf.if %11 {
      %c128_i32 = arith.constant 128 : i32
      %15 = arith.muli %arg1, %c128_i32 : i32
      %16 = tpu.iota {dimensions = array<i32: 1>} : vector<16x128xi32>
      %17 = vector.broadcast %15 : i32 to vector<16x128xi32>
      %18 = arith.addi %17, %16 : vector<16x128xi32>
      %c200_i32 = arith.constant 200 : i32
      %19 = vector.broadcast %c200_i32 : i32 to vector<16x128xi32>
      %20 = arith.cmpi slt, %18, %19 : vector<16x128xi32>
      %cst_9 = arith.constant 0xFF800000 : f32
      %21 = vector.broadcast %cst_9 : f32 to vector<16x128xf32>
      %22 = arith.select %20, %5, %21 : vector<16x128xi1>, vector<16x128xf32>
      %c0_10 = arith.constant 0 : index
      %c0_11 = arith.constant 0 : index
      %23 = vector.load %arg6[%c0_10, %c0_11] : memref<16x1xf32, #tpu.memory_space<vmem>>, vector<16x1xf32>
      %cst_12 = arith.constant dense<0xFF800000> : vector<16xf32>
      %24 = vector.multi_reduction <maximumf>, %22, %cst_12 [1] : vector<16x128xf32> to vector<16xf32>
      %25 = vector.shape_cast %24 : vector<16xf32> to vector<16x1xf32>
      %26 = arith.maximumf %23, %25 : vector<16x1xf32>
      %27 = arith.subf %23, %26 : vector<16x1xf32>
      %28 = math.exp %27 : vector<16x1xf32>
      %c0_13 = arith.constant 0 : index
      %c0_14 = arith.constant 0 : index
      %29 = vector.load %arg7[%c0_13, %c0_14] : memref<16x1xf32, #tpu.memory_space<vmem>>, vector<16x1xf32>
      %30 = arith.mulf %28, %29 : vector<16x1xf32>
      %31 = vector.broadcast %26 : vector<16x1xf32> to vector<16x128xf32>
      %32 = arith.subf %22, %31 : vector<16x128xf32>
      %33 = math.exp %32 : vector<16x128xf32>
      %cst_15 = arith.constant dense<0.000000e+00> : vector<16xf32>
      %34 = vector.multi_reduction <add>, %33, %cst_15 [1] : vector<16x128xf32> to vector<16xf32>
      %35 = vector.shape_cast %34 : vector<16xf32> to vector<16x1xf32>
      %36 = arith.addf %30, %35 : vector<16x1xf32>
      %c0_16 = arith.constant 0 : index
      %c0_17 = arith.constant 0 : index
      %37 = vector.load %arg7[%c0_16, %c0_17] : memref<16x1xf32, #tpu.memory_space<vmem>>, vector<16x1xf32>
      tpu.vector_store %arg7[%c0_16, %c0_17], %36 {strides = array<i32>} : memref<16x1xf32, #tpu.memory_space<vmem>>, vector<16x1xf32>,
      %c0_18 = arith.constant 0 : index
      %c0_19 = arith.constant 0 : index
      %38 = vector.load %arg6[%c0_18, %c0_19] : memref<16x1xf32, #tpu.memory_space<vmem>>, vector<16x1xf32>
      tpu.vector_store %arg6[%c0_18, %c0_19], %26 {strides = array<i32>} : memref<16x1xf32, #tpu.memory_space<vmem>>, vector<16x1xf32>,
    } else {
    }
    %c1_i32_7 = arith.constant 1 : i32
    %12 = arith.cmpi eq, %arg1, %c1_i32_7 : i32
    %13 = arith.extui %12 : i1 to i32
    %c0_i32_8 = arith.constant 0 : i32
    %14 = arith.cmpi ne, %13, %c0_i32_8 : i32
    scf.if %14 {
      %c0_9 = arith.constant 0 : index
      %c0_10 = arith.constant 0 : index
      %15 = vector.load %arg6[%c0_9, %c0_10] : memref<16x1xf32, #tpu.memory_space<vmem>>, vector<16x1xf32>
      %c0_11 = arith.constant 0 : index
      %c0_12 = arith.constant 0 : index
      %16 = vector.load %arg7[%c0_11, %c0_12] : memref<16x1xf32, #tpu.memory_space<vmem>>, vector<16x1xf32>
      %17 = math.log %16 : vector<16x1xf32>
      %18 = arith.addf %15, %17 : vector<16x1xf32>
      %c0_13 = arith.constant 0 : index
      %c0_14 = arith.constant 0 : index
      %19 = vector.load %arg8[%c0_13, %c0_14] : memref<16x1xf32, #tpu.memory_space<vmem>>, vector<16x1xf32>
      %20 = arith.subf %18, %19 : vector<16x1xf32>
      %21 = vector.shape_cast %20 : vector<16x1xf32> to vector<16x1xf32>
      %22 = vector.broadcast %21 : vector<16x1xf32> to vector<16x128xf32>
      %c0_15 = arith.constant 0 : index
      %c0_16 = arith.constant 0 : index
      %23 = vector.load %arg5[%c0_15, %c0_16] : memref<16x128xf32, #tpu.memory_space<vmem>>, vector<16x128xf32>
      tpu.vector_store %arg5[%c0_15, %c0_16], %22 {strides = array<i32>} : memref<16x128xf32, #tpu.memory_space<vmem>>, vector<16x128xf32>,
    } else {
    }
    return
  }
  func.func @transform_0(%arg0: i32, %arg1: i32) -> (i32, i32) {
    %c0_i32 = arith.constant 0 : i32
    %c0_i32_0 = arith.constant 0 : i32
    return %arg0, %c0_i32 : i32, i32
  }
  func.func @transform_1(%arg0: i32, %arg1: i32) -> (i32, i32) {
    %c0_i32 = arith.constant 0 : i32
    %c0_i32_0 = arith.constant 0 : i32
    return %arg0, %c0_i32 : i32, i32
  }
  func.func @transform_2(%arg0: i32, %arg1: i32) -> (i32, i32) {
    %c0_i32 = arith.constant 0 : i32
    %c0_i32_0 = arith.constant 0 : i32
    return %c0_i32, %arg1 : i32, i32
  }
  func.func @transform_3(%arg0: i32, %arg1: i32) -> (i32, i32) {
    %c0_i32 = arith.constant 0 : i32
    %c0_i32_0 = arith.constant 0 : i32
    return %arg0, %c0_i32 : i32, i32
  }
}

</mosaic_0001>

<llo_original>
// kernel: tpu_custom_call.1
$region0: #{tpu_custom_call.1}
  #allocation0 [shape = 'u32[]', space=smem, size = 0x4, offset = 0x4, fixed_abs, tag = 'smem constant byte address 0x4 - core index']
  #allocation1 [shape = 'u32[144,128]{1,0:T(1,128)}', space=vmem, size = 0x12000, scoped, tag = 'internal scratch']
  #allocation2 [shape = 'f32[16,1]{1,0:T(8,128)}', space=vmem, size = 0x2000, scoped, tag = 'scratch operand']
  #allocation3 [shape = 'f32[16,1]{1,0:T(8,128)}', space=vmem, size = 0x2000, scoped, tag = 'scratch operand']
  #allocation4 [shape = 'f32[16,1]{1,0:T(8,128)}', space=vmem, size = 0x2000, scoped, tag = 'scratch operand']
  #allocation5 [shape = 'f32[16,32]{1,0:T(8,128)}', space=vmem, size = 0x2000, scoped, tag = 'scratch operand']
  %s0 = inlined_call_operand.hbm [shape: f32[16,32], index: 0, kind: input, shape index: {}]
  %s1 = inlined_call_operand.hbm [shape: f32[16,32], index: 1, kind: input, shape index: {}]
  %s2 = inlined_call_operand.hbm [shape: f32[32,256], index: 2, kind: input, shape index: {}]
  %s3 = inlined_call_operand.hbm [shape: f32[16,128], index: 3, kind: output, shape index: {}]
  %s4 = sld [smem:[#allocation0]]
  $region69: #{tpu_custom_call.1} parent=0
    _
  %s6 = ssub.s32 1, %s4
  %s7 = scalar_select 0, %s6, %s4
  $region1: #{tpu_custom_call.1} parent=0
    #allocation6 [shape = 'u8[8192]{0}', space=vmem, size = 0x2000, scoped, tag = 'input window, operand 0, single buffered']
    #allocation7 [shape = 's32[2]{0}', space=sflag, size = 0x8, scoped, tag = 'scoped memory for tpu_custom_call.1']
    #allocation8 [shape = 's32[2]{0}', space=sflag, size = 0x8, scoped, tag = 'scoped memory for tpu_custom_call.1']
    #allocation9 [shape = 'u8[8192]{0}', space=vmem, size = 0x2000, scoped, tag = 'input window, operand 1, single buffered']
    #allocation10 [shape = 's32[1]{0}', space=sflag, size = 0x4, scoped, tag = 'scoped memory for tpu_custom_call.1']
    #allocation11 [shape = 'u8[32768]{0}', space=vmem, size = 0x8000, scoped, tag = 'input window, operand 2']
    #allocation12 [shape = 'u8[8192]{0}', space=vmem, size = 0x2000, scoped, tag = 'output window, operand 0, single buffered']
    %8 = vsyncpa [#allocation7], 0
    %9 = vsyncpa [#allocation10], 0
    %10 = vsyncpa [#allocation8], 0
    loop: start=0, step=1, limit=4
    $region2: #{tpu_custom_call.1} parent=1 // loop_pre_header
      _
    $region3: #{tpu_custom_call.1} parent=1 // loop_header
      %s12 = sphi 0, %s16
      %p13 = scmp.ge.s32.totalorder %s12, 4
      %s19 = sphi 0, %s31
      %s20 = sphi 0, %s27
      %s21 = sphi 0, %s19
      %s22 = sphi 0, %s20
      %s23 = sphi 0, %s21
      %s24 = sphi 0, %s22
      %s34 = sphi 0, %s36
      %s37 = sphi 0, %s34
      %s38 = sphi 0, %s37
      %s54 = sphi 0, %s38
      %s60 = sphi 0, %s62
      %s63 = sphi 0, %s60
      %s64 = sphi 0, %s63
      %s80 = sphi 0, %s64
      %s86 = sphi 0, %s88
      %s89 = sphi 0, %s86
      %s90 = sphi 0, %s89
      %s106 = sphi 0, %s90
      %s112 = sphi 0, %s114
      %s115 = sphi 0, %s112
      %s116 = sphi 0, %s115
      %s132 = sphi 0, %s116
    $region4: #{tpu_custom_call.1} parent=1 // loop_header_branch
      %15 = sbr.rel (%p13) target = $region8
    $region5: #{tpu_custom_call.1} parent=1 // loop_body
      %s17 = ssub.s32 %s12, 1
      %s18 = ssub.s32 %s12, 2
      %s25 = sadd.s32 1, %s20
      %p26 = scmp.ge.s32.totalorder %s25, 2
      %s27 = scalar_select %p26, 0, %s25
      %s28 = sadd.s32 1, %s19
      %s29 = scalar_select %p26, %s28, %s19
      %p30 = scmp.ge.s32.totalorder %s29, 1
      %s31 = scalar_select %p30, 0, %s29
      %s32 = ssub.s32 %s19, %s31
      %p33 = scmp.eq.s32.totalorder %s32, 0
      %s35 = sadd.s32 %s34, 1
      %s36 = scalar_select %p33, %s34, %s35
      %p39 = pneg %p33
      %p40 = scmp.eq.s32.totalorder %s12, 1
      %p41 = por %p39, %p40
      %p42 = scmp.ne.s32.totalorder %s34, %s37
      %p43 = scmp.eq.s32.totalorder %s12, 0
      %p44 = por %p42, %p43
      %p45 = scmp.ne.s32.totalorder %s34, %s37
      %p46 = scmp.eq.s32.totalorder %s17, 1
      %p47 = por %p45, %p46
      %p48 = scmp.ne.s32.totalorder %s37, %s38
      %p49 = scmp.eq.s32.totalorder %s17, 0
      %p50 = por %p48, %p49
      %p51 = scmp.ne.s32.totalorder %s37, %s38
      %p52 = scmp.eq.s32.totalorder %s18, 1
      %p53 = por %p51, %p52
      %p55 = scmp.ne.s32.totalorder %s38, %s54
      %p56 = scmp.eq.s32.totalorder %s18, 0
      %p57 = por %p55, %p56
      %s58 = ssub.s32 %s19, %s31
      %p59 = scmp.eq.s32.totalorder %s58, 0
      %s61 = sadd.s32 %s60, 1
      %s62 = scalar_select %p59, %s60, %s61
      %p65 = pneg %p59
      %p66 = scmp.eq.s32.totalorder %s12, 1
      %p67 = por %p65, %p66
      %p68 = scmp.ne.s32.totalorder %s60, %s63
      %p69 = scmp.eq.s32.totalorder %s12, 0
      %p70 = por %p68, %p69
      %p71 = scmp.ne.s32.totalorder %s60, %s63
      %p72 = scmp.eq.s32.totalorder %s17, 1
      %p73 = por %p71, %p72
      %p74 = scmp.ne.s32.totalorder %s63, %s64
      %p75 = scmp.eq.s32.totalorder %s17, 0
      %p76 = por %p74, %p75
      %p77 = scmp.ne.s32.totalorder %s63, %s64
      %p78 = scmp.eq.s32.totalorder %s18, 1
      %p79 = por %p77, %p78
      %p81 = scmp.ne.s32.totalorder %s64, %s80
      %p82 = scmp.eq.s32.totalorder %s18, 0
      %p83 = por %p81, %p82
      %s84 = ssub.s32 %s20, %s27
      %p85 = scmp.eq.s32.totalorder %s84, 0
      %s87 = sadd.s32 %s86, 1
      %s88 = scalar_select %p85, %s86, %s87
      %p91 = pneg %p85
      %p92 = scmp.eq.s32.totalorder %s12, 1
      %p93 = por %p91, %p92
      %p94 = scmp.ne.s32.totalorder %s86, %s89
      %p95 = scmp.eq.s32.totalorder %s12, 0
      %p96 = por %p94, %p95
      %p97 = scmp.ne.s32.totalorder %s86, %s89
      %p98 = scmp.eq.s32.totalorder %s17, 1
      %p99 = por %p97, %p98
      %p100 = scmp.ne.s32.totalorder %s89, %s90
      %p101 = scmp.eq.s32.totalorder %s17, 0
      %p102 = por %p100, %p101
      %p103 = scmp.ne.s32.totalorder %s89, %s90
      %p104 = scmp.eq.s32.totalorder %s18, 1
      %p105 = por %p103, %p104
      %p107 = scmp.ne.s32.totalorder %s90, %s106
      %p108 = scmp.eq.s32.totalorder %s18, 0
      %p109 = por %p107, %p108
      %s110 = ssub.s32 %s19, %s31
      %p111 = scmp.eq.s32.totalorder %s110, 0
      %s113 = sadd.s32 %s112, 1
      %s114 = scalar_select %p111, %s112, %s113
      %p117 = pneg %p111
      %p118 = scmp.eq.s32.totalorder %s12, 1
      %p119 = por %p117, %p118
      %p120 = scmp.ne.s32.totalorder %s112, %s115
      %p121 = scmp.eq.s32.totalorder %s12, 0
      %p122 = por %p120, %p121
      %p123 = scmp.ne.s32.totalorder %s112, %s115
      %p124 = scmp.eq.s32.totalorder %s17, 1
      %p125 = por %p123, %p124
      %p126 = scmp.ne.s32.totalorder %s115, %s116
      %p127 = scmp.eq.s32.totalorder %s17, 0
      %p128 = por %p126, %p127
      %p129 = scmp.ne.s32.totalorder %s115, %s116
      %p130 = scmp.eq.s32.totalorder %s18, 1
      %p131 = por %p129, %p130
      %p133 = scmp.ne.s32.totalorder %s116, %s132
      %p134 = scmp.eq.s32.totalorder %s18, 0
      %p135 = por %p133, %p134
      %p136 = scmp.le.s32.totalorder 1, %s12
      %p137 = scmp.lt.s32.totalorder %s12, 3
      %p138 = pnand %p136, %p137
      %p139 = pneg %p138
      // Predicated region
      $region9: #{tpu_custom_call.1} parent=5 // pred_check
        _
      $region10: #{tpu_custom_call.1} parent=5 // pred_check_branch
        %141 = sbr.rel (%p138) target = $region12
      $region11: #{tpu_custom_call.1} parent=5 // pred_region
        %s142 = ssub.s32 %s12, 1
        // Predicated region
        $region13: #{tpu_custom_call.1} parent=11 // pred_check
          %p143 = pneg %p50
        $region14: #{tpu_custom_call.1} parent=11 // pred_check_branch
          %145 = sbr.rel (%p143) target = $region16
        $region15: #{tpu_custom_call.1} parent=11 // pred_region
          %s146 = smul.u32 2, %s21
          %s148 = ssub.s32 256, 256
          %149 = vsyncadd [#allocation7], %s148
          %s150 = smul.addr %s146, 128
          %s151 = scalar_lea.hbm %s0, %s150
          %s152 = sshll.u32 [#allocation6], 4
          %s153 = int_to_ptr.vmem [resolvable:$true] %s152
          %158 = dma.hbm_to_vmem [thread:$0]  %s151, 256, %s153, [#allocation7], 128, 128, 8
        $region16: #{tpu_custom_call.1} parent=11 // pred_fallthru
          _
        // Predicated region
        $region17: #{tpu_custom_call.1} parent=11 // pred_check
          %p159 = pneg %p76
        $region18: #{tpu_custom_call.1} parent=11 // pred_check_branch
          %161 = sbr.rel (%p159) target = $region20
        $region19: #{tpu_custom_call.1} parent=11 // pred_region
          %s162 = smul.u32 2, %s21
          %s164 = ssub.s32 256, 256
          %165 = vsyncadd [#allocation10], %s164
          %s166 = smul.addr %s162, 128
          %s167 = scalar_lea.hbm %s1, %s166
          %s168 = sshll.u32 [#allocation9], 4
          %s169 = int_to_ptr.vmem [resolvable:$true] %s168
          %174 = dma.hbm_to_vmem [thread:$0]  %s167, 256, %s169, [#allocation10], 128, 128, 8
        $region20: #{tpu_custom_call.1} parent=11 // pred_fallthru
          _
      $region12: #{tpu_custom_call.1} parent=5 // pred_fallthru
        _
      %p175 = scmp.lt.s32.totalorder %s12, 2
      // Predicated region
      $region21: #{tpu_custom_call.1} parent=5 // pred_check
        %p176 = pneg %p175
      $region22: #{tpu_custom_call.1} parent=5 // pred_check_branch
        %178 = sbr.rel (%p176) target = $region24
      $region23: #{tpu_custom_call.1} parent=5 // pred_region
        // Predicated region
        $region25: #{tpu_custom_call.1} parent=23 // pred_check
          %p179 = pneg %p96
        $region26: #{tpu_custom_call.1} parent=23 // pred_check_branch
          %181 = sbr.rel (%p179) target = $region28
        $region27: #{tpu_custom_call.1} parent=23 // pred_region
          %s182 = sand.u32 %s12, 1
          %s183 = scalar_lea.sflag [#allocation7], %s182
          %s184 = sand.u32 %s86, 1
          %s185 = smul.addr %s184, 32
          %s186 = scalar_lea.vmem [#allocation11], %s185
          %s188 = ssub.s32 512, 512
          %189 = vsyncadd %s183, %s188
          %s190 = smul.addr %s20, 128
          %s191 = scalar_lea.hbm %s2, %s190
          %s192 = sshll.u32 %s186, 4
          %s193 = int_to_ptr.vmem [resolvable:$true] %s192
          %198 = dma.hbm_to_vmem [thread:$0]  %s191, 512, %s193, %s183, 256, 128, 8
        $region28: #{tpu_custom_call.1} parent=23 // pred_fallthru
          _
      $region24: #{tpu_custom_call.1} parent=5 // pred_fallthru
        _
      %p199 = scmp.le.s32.totalorder 1, %s12
      %p200 = scmp.lt.s32.totalorder %s12, 3
      %p201 = pnand %p199, %p200
      %p202 = pneg %p201
      // Predicated region
      $region29: #{tpu_custom_call.1} parent=5 // pred_check
        _
      $region30: #{tpu_custom_call.1} parent=5 // pred_check_branch
        %204 = sbr.rel (%p201) target = $region32
      $region31: #{tpu_custom_call.1} parent=5 // pred_region
        %s205 = ssub.s32 %s12, 1
        // Predicated region
        $region33: #{tpu_custom_call.1} parent=31 // pred_check
          %p206 = pneg %p50
        $region34: #{tpu_custom_call.1} parent=31 // pred_check_branch
          %208 = sbr.rel (%p206) target = $region36
        $region35: #{tpu_custom_call.1} parent=31 // pred_region
          %209 = dma.done [#allocation7], 256
        $region36: #{tpu_custom_call.1} parent=31 // pred_fallthru
          _
        // Predicated region
        $region37: #{tpu_custom_call.1} parent=31 // pred_check
          %p210 = pneg %p76
        $region38: #{tpu_custom_call.1} parent=31 // pred_check_branch
          %212 = sbr.rel (%p210) target = $region40
        $region39: #{tpu_custom_call.1} parent=31 // pred_region
          %213 = dma.done [#allocation10], 256
        $region40: #{tpu_custom_call.1} parent=31 // pred_fallthru
          _
        %s214 = sand.u32 %s17, 1
        %s215 = scalar_lea.sflag [#allocation7], %s214
        %s216 = sand.u32 %s89, 1
        %s217 = smul.addr %s216, 32
        %s218 = scalar_lea.vmem [#allocation11], %s217
        // Predicated region
        $region41: #{tpu_custom_call.1} parent=31 // pred_check
          %p219 = pneg %p102
        $region42: #{tpu_custom_call.1} parent=31 // pred_check_branch
          %221 = sbr.rel (%p219) target = $region44
        $region43: #{tpu_custom_call.1} parent=31 // pred_region
          %222 = dma.done %s215, 512
        $region44: #{tpu_custom_call.1} parent=31 // pred_fallthru
          _
        %p223 = pneg %p50
        %p224 = pneg %p47
        %p225 = pneg %p76
        %p226 = pneg %p73
        %s227 = sand.u32 %s17, 1
        %s228 = scalar_lea.sflag [#allocation7], %s227
        %s229 = sand.u32 %s89, 1
        %s230 = smul.addr %s229, 32
        %s231 = scalar_lea.vmem [#allocation11], %s230
        %p232 = pneg %p102
        %p233 = pneg %p99
        %p234 = pneg %p128
        %p235 = pneg %p125
        %s236 = smul.u32 2, %s21
        %s237 = smul.u32 2, %s21
        %s238 = smul.u32 2, %s21
        %p239 = scmp.eq.s32.totalorder %s22, 0
        // Predicated region
        $region45: #{tpu_custom_call.1} parent=31 // pred_check
          %p240 = pneg %p239
        $region46: #{tpu_custom_call.1} parent=31 // pred_check_branch
          %242 = sbr.rel (%p240) target = $region48
        $region47: #{tpu_custom_call.1} parent=31 // pred_region
          %v243 = vld [vmem:[#allocation6] sm:$0xff]
          %v244 = vld [vmem:[#allocation6 + $0x8] sm:$0xff]
          %v245 = vld [vmem:[#allocation9] sm:$0xff]
          %v246 = vld [vmem:[#allocation9 + $0x8] sm:$0xff]
          %v247 = vmul.f32 %v243, %v245
          %v248 = vmul.f32 %v244, %v246
          %vm249 = vcmask 261120
          %v250 = vsel %vm249, %v247, 0.0
          %251 = vadd.xlane.f32.xlu0 %v250
          %v252 = vpop.xlane.xlu0 %251
          %v253 = vsel %vm249, %v248, 0.0
          %254 = vadd.xlane.f32.xlu0 %v253
          %v255 = vpop.xlane.xlu0 %254
          %v256 = vmul.f32 %v252, 33.333332
          %v257 = vmul.f32 %v255, 33.333332
          %vm258 = vcmask 7168
          %259 = vst.msk [vmem:[#allocation4] sm:$0xff] %vm258, %v256
          %260 = vst.msk [vmem:[#allocation4 + $0x8] sm:$0xff] %vm258, %v257
          %261 = vst.msk [vmem:[#allocation2] sm:$0xff] %vm258, %v256
          %262 = vst.msk [vmem:[#allocation2 + $0x8] sm:$0xff] %vm258, %v257
          %263 = vst.msk [vmem:[#allocation3] sm:$0xff] %vm258, 1.0
          %264 = vst.msk [vmem:[#allocation3 + $0x8] sm:$0xff] %vm258, 1.0
          %v265 = vmul.f32 %v243, 33.333332
          %v266 = vmul.f32 %v244, 33.333332
          %267 = vst.msk [vmem:[#allocation5] sm:$0xff] %vm249, %v265
          %268 = vst.msk [vmem:[#allocation5 + $0x8] sm:$0xff] %vm249, %v266
        $region48: #{tpu_custom_call.1} parent=31 // pred_fallthru
          _
        %v269 = vld [vmem:[#allocation5] sm:$0xff]
        %v270 = vld [vmem:[#allocation5 + $0x8] sm:$0xff]
        %v271 = vld [vmem:[%s218] sm:$0xff]
        %v272 = vld [vmem:[%s218 + $0x8] sm:$0xff]
        %v273 = vld [vmem:[%s218 + $0x10] sm:$0xff]
        %v274 = vld [vmem:[%s218 + $0x18] sm:$0xff]
        %vm275 = vcmask 261120
        %v277 = vsel %vm275, %v269, 0
        %v280 = vsel %vm275, %v270, 0
        %282 = vmatprep.subr.mxu0 0.0
        %283 = vmatpush1.msra.mxu0 0.0
        %284 = vmatprep.subr.mxu0 0.0
        %285 = vmatpush1.msra.mxu0 0.0
        %286 = vmatprep.subr.mxu0 0.0
        %287 = vmatpush1.msra.mxu0 0.0
        %288 = vmatprep.subr.mxu0 0.0
        %289 = vmatpush1.msra.mxu0 0.0
        %290 = vmatprep.subr.mxu0 0.0
        %291 = vmatpush1.msra.mxu0 0.0
        %292 = vmatprep.subr.mxu0 0.0
        %293 = vmatpush1.msra.mxu0 0.0
        %294 = vmatprep.subr.mxu0 0.0
        %295 = vmatpush1.msra.mxu0 0.0
        %296 = vmatprep.subr.mxu0 0.0
        %297 = vmatpush1.msra.mxu0 0.0
        %298 = vmatprep.subr.mxu0 0.0
        %299 = vmatpush1.msra.mxu0 0.0
        %300 = vmatprep.subr.mxu0 0.0
        %301 = vmatpush1.msra.mxu0 0.0
        %302 = vmatprep.subr.mxu0 0.0
        %303 = vmatpush1.msra.mxu0 0.0
        %304 = vmatprep.subr.mxu0 0.0
        %305 = vmatpush1.msra.mxu0 0.0
        %306 = vmatprep.subr.mxu0 0.0
        %307 = vmatpush1.msra.mxu0 %v274
        %308 = vmatprep.subr.mxu0 0.0
        %309 = vmatpush1.msra.mxu0 %v273
        %310 = vmatprep.subr.mxu0 0.0
        %311 = vmatpush1.msra.mxu0 %v272
        %312 = vmatprep.subr.mxu0 0.0
        %313 = vmatpush1.msra.mxu0 %v271
        %314 = vmatprep.subr.mxu0 0.0
        %315 = vmatpush2.msra.mxu0 0.0
        %316 = vmatprep.subr.mxu0 0.0
        %317 = vmatpush2.msra.mxu0 0.0
        %318 = vmatprep.subr.mxu0 0.0
        %319 = vmatpush2.msra.mxu0 0.0
        %320 = vmatprep.subr.mxu0 0.0
        %321 = vmatpush2.msra.mxu0 0.0
        %322 = vmatprep.subr.mxu0 0.0
        %323 = vmatpush2.msra.mxu0 0.0
        %324 = vmatprep.subr.mxu0 0.0
        %325 = vmatpush2.msra.mxu0 0.0
        %326 = vmatprep.subr.mxu0 0.0
        %327 = vmatpush2.msra.mxu0 0.0
        %328 = vmatprep.subr.mxu0 0.0
        %329 = vmatpush2.msra.mxu0 0.0
        %330 = vmatprep.subr.mxu0 0.0
        %331 = vmatpush2.msra.mxu0 0.0
        %332 = vmatprep.subr.mxu0 0.0
        %333 = vmatpush2.msra.mxu0 0.0
        %334 = vmatprep.subr.mxu0 0.0
        %335 = vmatpush2.msra.mxu0 0.0
        %336 = vmatprep.subr.mxu0 0.0
        %337 = vmatpush2.msra.mxu0 0.0
        %338 = vmatprep.subr.mxu0 0.0
        %339 = vmatpush2.msra.mxu0 0.0
        %340 = vmatprep.subr.mxu0 0.0
        %341 = vmatpush2.msra.mxu0 0.0
        %342 = vmatprep.subr.mxu0 0.0
        %343 = vmatpush2.msra.mxu0 0.0
        %344 = vmatprep.subr.mxu0 0.0
        %345 = vmatpush2.msra.mxu0 0.0
        %346 = vmatprep.mubr.f32.mxu0 0.0
        %347 = vmatmul.mubr.f32.gmra.mxu0 %v277
        %v348 = vpop.f32.mrf.mxu0
        %v349 = vadd.f32 0.0, %v348
        %v350 = vpop.f32.mrf.mxu0
        %351 = vmatprep.mubr.f32.mxu0 0.0
        %352 = vmatmul.mubr.f32.gmra.mxu0 %v280
        %v353 = vpop.f32.mrf.mxu0
        %v354 = vadd.f32 0.0, %v353
        %v355 = vpop.f32.mrf.mxu0
        %356 = vdwg.mxu0
        %p357 = scmp.ne.s32.totalorder %s22, 1
        // Predicated region
        $region49: #{tpu_custom_call.1} parent=31 // pred_check
          %p358 = pneg %p357
        $region50: #{tpu_custom_call.1} parent=31 // pred_check_branch
          %360 = sbr.rel (%p358) target = $region52
        $region51: #{tpu_custom_call.1} parent=31 // pred_region
          %v361 = vld [vmem:[#allocation2] sm:$0xff]
          %v362 = vld [vmem:[#allocation2 + $0x8] sm:$0xff]
          %363 = vmax.xlane.f32.xlu0 %v349
          %v364 = vpop.xlane.xlu0 %363
          %365 = vmax.xlane.f32.xlu0 %v354
          %v366 = vpop.xlane.xlu0 %365
          %v367 = vmax.f32 %v361, %v364
          %v368 = vmax.f32 %v362, %v366
          %v369 = vsub.f32 %v361, %v367
          %v370 = vsub.f32 %v362, %v368
          %v371 = vmul.f32 %v369, 1.442695
          %v372 = vpow.pop %v371
          %v373 = vmul.f32 %v370, 1.442695
          %v374 = vpow.pop %v373
          %v375 = vld [vmem:[#allocation3] sm:$0xff]
          %v376 = vld [vmem:[#allocation3 + $0x8] sm:$0xff]
          %v377 = vmul.f32 %v372, %v375
          %v378 = vmul.f32 %v374, %v376
          %380 = vset.pattern.permute.xlu0 0
          %381 = vperm.xlu0 %380, %v367
          %v382 = vpop.permute.xlu0 %381
          %385 = vset.pattern.permute.xlu0 0
          %386 = vperm.xlu0 %385, %v368
          %v387 = vpop.permute.xlu0 %386
          %v389 = vsub.f32 %v349, %v382
          %v390 = vsub.f32 %v354, %v387
          %v391 = vmul.f32 %v389, 1.442695
          %v392 = vpow.pop %v391
          %v393 = vmul.f32 %v390, 1.442695
          %v394 = vpow.pop %v393
          %395 = vadd.xlane.f32.xlu0 %v392
          %v396 = vpop.xlane.xlu0 %395
          %397 = vadd.xlane.f32.xlu0 %v394
          %v398 = vpop.xlane.xlu0 %397
          %v399 = vadd.f32 %v377, %v396
          %v400 = vadd.f32 %v378, %v398
          %vm401 = vcmask 7168
          %402 = vst.msk [vmem:[#allocation3] sm:$0xff] %vm401, %v399
          %403 = vst.msk [vmem:[#allocation3 + $0x8] sm:$0xff] %vm401, %v400
          %404 = vst.msk [vmem:[#allocation2] sm:$0xff] %vm401, %v367
          %405 = vst.msk [vmem:[#allocation2 + $0x8] sm:$0xff] %vm401, %v368
        $region52: #{tpu_custom_call.1} parent=31 // pred_fallthru
          _
        %p406 = scmp.eq.s32.totalorder %s22, 1
        // Predicated region
        $region53: #{tpu_custom_call.1} parent=31 // pred_check
          %p407 = pneg %p406
        $region54: #{tpu_custom_call.1} parent=31 // pred_check_branch
          %409 = sbr.rel (%p407) target = $region56
        $region55: #{tpu_custom_call.1} parent=31 // pred_region
          %s410 = smul.u32 %s22, 128
          %v411 = vlaneseq
          %v412 = vand.u32 %v411, 127
          %v413 = vstv %s410
          %v414 = vadd.s32 %v413, %v412
          %vm415 = vcmp.lt.s32.totalorder %v414, 200
          %v416 = vsel %vm415, %v349, -inf
          %v417 = vsel %vm415, %v354, -inf
          %v418 = vld [vmem:[#allocation2] sm:$0xff]
          %v419 = vld [vmem:[#allocation2 + $0x8] sm:$0xff]
          %420 = vmax.xlane.f32.xlu0 %v416
          %v421 = vpop.xlane.xlu0 %420
          %422 = vmax.xlane.f32.xlu0 %v417
          %v423 = vpop.xlane.xlu0 %422
          %v424 = vmax.f32 %v418, %v421
          %v425 = vmax.f32 %v419, %v423
          %v426 = vsub.f32 %v418, %v424
          %v427 = vsub.f32 %v419, %v425
          %v428 = vmul.f32 %v426, 1.442695
          %v429 = vpow.pop %v428
          %v430 = vmul.f32 %v427, 1.442695
          %v431 = vpow.pop %v430
          %v432 = vld [vmem:[#allocation3] sm:$0xff]
          %v433 = vld [vmem:[#allocation3 + $0x8] sm:$0xff]
          %v434 = vmul.f32 %v429, %v432
          %v435 = vmul.f32 %v431, %v433
          %437 = vset.pattern.permute.xlu0 0
          %438 = vperm.xlu0 %437, %v424
          %v439 = vpop.permute.xlu0 %438
          %442 = vset.pattern.permute.xlu0 0
          %443 = vperm.xlu0 %442, %v425
          %v444 = vpop.permute.xlu0 %443
          %v446 = vsub.f32 %v416, %v439
          %v447 = vsub.f32 %v417, %v444
          %v448 = vmul.f32 %v446, 1.442695
          %v449 = vpow.pop %v448
          %v450 = vmul.f32 %v447, 1.442695
          %v451 = vpow.pop %v450
          %452 = vadd.xlane.f32.xlu0 %v449
          %v453 = vpop.xlane.xlu0 %452
          %454 = vadd.xlane.f32.xlu0 %v451
          %v455 = vpop.xlane.xlu0 %454
          %v456 = vadd.f32 %v434, %v453
          %v457 = vadd.f32 %v435, %v455
          %vm458 = vcmask 7168
          %459 = vst.msk [vmem:[#allocation3] sm:$0xff] %vm458, %v456
          %460 = vst.msk [vmem:[#allocation3 + $0x8] sm:$0xff] %vm458, %v457
          %461 = vst.msk [vmem:[#allocation2] sm:$0xff] %vm458, %v424
          %462 = vst.msk [vmem:[#allocation2 + $0x8] sm:$0xff] %vm458, %v425
          %v463 = vld [vmem:[#allocation2] sm:$0xff]
          %v464 = vld [vmem:[#allocation2 + $0x8] sm:$0xff]
          %v465 = vld [vmem:[#allocation3] sm:$0xff]
          %v466 = vld [vmem:[#allocation3 + $0x8] sm:$0xff]
          %v467 = vlog2.pop %v465
          %v468 = vmul.f32 %v467, 0.6931472
          %v469 = vlog2.pop %v466
          %v470 = vmul.f32 %v469, 0.6931472
          %v471 = vadd.f32 %v463, %v468
          %v472 = vadd.f32 %v464, %v470
          %v473 = vld [vmem:[#allocation4] sm:$0xff]
          %v474 = vld [vmem:[#allocation4 + $0x8] sm:$0xff]
          %v475 = vsub.f32 %v471, %v473
          %v476 = vsub.f32 %v472, %v474
          %478 = vset.pattern.permute.xlu0 0
          %479 = vperm.xlu0 %478, %v475
          %v480 = vpop.permute.xlu0 %479
          %483 = vset.pattern.permute.xlu0 0
          %484 = vperm.xlu0 %483, %v476
          %v485 = vpop.permute.xlu0 %484
          %487 = vst [vmem:[#allocation12] sm:$0xff] %v480
          %488 = vst [vmem:[#allocation12 + $0x8] sm:$0xff] %v485
        $region56: #{tpu_custom_call.1} parent=31 // pred_fallthru
          _
        // Predicated region
        $region57: #{tpu_custom_call.1} parent=31 // pred_check
          %p489 = pneg %p125
        $region58: #{tpu_custom_call.1} parent=31 // pred_check_branch
          %491 = sbr.rel (%p489) target = $region60
        $region59: #{tpu_custom_call.1} parent=31 // pred_region
          %s492 = smul.u32 2, %s21
          %s494 = ssub.s32 256, 256
          %495 = vsyncadd [#allocation8], %s494
          %s496 = smul.addr %s492, 128
          %s497 = scalar_lea.hbm %s3, %s496
          %s498 = sshll.u32 [#allocation12], 4
          %s499 = int_to_ptr.vmem [resolvable:$true] %s498
          %504 = dma.vmem_to_hbm [thread:$0]  %s499, 256, %s497, [#allocation8], 128, 128, 8
        $region60: #{tpu_custom_call.1} parent=31 // pred_fallthru
          _
        // Predicated region
        $region61: #{tpu_custom_call.1} parent=31 // pred_check
          %p505 = pneg %p125
        $region62: #{tpu_custom_call.1} parent=31 // pred_check_branch
          %507 = sbr.rel (%p505) target = $region64
        $region63: #{tpu_custom_call.1} parent=31 // pred_region
          %508 = dma.done [#allocation8], 256
        $region64: #{tpu_custom_call.1} parent=31 // pred_fallthru
          _
      $region32: #{tpu_custom_call.1} parent=5 // pred_fallthru
        _
      %p509 = scmp.le.s32.totalorder 2, %s12
      // Predicated region
      $region65: #{tpu_custom_call.1} parent=5 // pred_check
        %p510 = pneg %p509
      $region66: #{tpu_custom_call.1} parent=5 // pred_check_branch
        %512 = sbr.rel (%p510) target = $region68
      $region67: #{tpu_custom_call.1} parent=5 // pred_region
        %s513 = ssub.s32 %s12, 2
      $region68: #{tpu_custom_call.1} parent=5 // pred_fallthru
        _
    $region6: #{tpu_custom_call.1} parent=1 // loop_footer
      %s16 = sadd.s32 1, %s12
    $region7: #{tpu_custom_call.1} parent=1 // loop_footer_branch
      %11 = sbr.rel target = $region3
    $region8: #{tpu_custom_call.1} parent=1 // loop_exit
      _
    %514 = vsyncpa [#allocation7], 1
    %s515 = scalar_lea.sflag [#allocation7], 1
    %516 = vsyncpa %s515, 1
    %517 = vsyncpa [#allocation10], 1
    %518 = vsyncpa [#allocation8], 1
    %s519 = scalar_lea.sflag [#allocation8], 1
    %520 = vsyncpa %s519, 1

</llo_original>
